<compile_context>
chip_gen: v6e
topology: v6e:2x2x1
jax: 0.10.0
libtpu: 0.0.40
codegen_flags: <defaults>
</compile_context>

<pallas_src>
import jax
import jax.numpy as jnp
from jax.experimental import pallas as pl
from jax.experimental.pallas import tpu as pltpu


def _shuffle_last_kernel(w_ref, b_ref, x_ref, o_ref):
    # w_ref: (Cout, Cin)   BN-folded weight, resident across all grid steps
    # b_ref: (Cout, 1)     BN-folded bias (broadcasts over the lane/spatial dim)
    # x_ref: (Nb, Cin, ts) spatial tiles of Nb images, channels on sublanes
    # o_ref: (Nb, Cout, ts) lane-dense output tiles
    w = w_ref[...]
    b = b_ref[...]
    nb = x_ref.shape[0]
    # Small static unroll over the images packed into this block. Each image is
    # an independent (Cout, Cin) @ (Cin, ts) matmul -> no in-kernel transposes
    # or relayouts, and every store is a full-width lane-dense store.
    for i in range(nb):
        acc = jnp.dot(w, x_ref[i], preferred_element_type=jnp.float32)
        o_ref[i] = jnp.maximum(acc + b, 0.0).astype(o_ref.dtype)


def _choose_tiling(N, Cin, Cout, HW, in_bytes, out_bytes,
                   target_step_bytes=4 * 1024 * 1024):
    """Pick (Nb, ts, n_b, n_s): size grid steps by HBM traffic (~few MB/step),
    keep >=2 grid blocks when possible, and prefer tiles with no masked tail."""
    # Spatial tile: full H*W when small, otherwise a multiple of 128 lanes,
    # preferring one that divides H*W so there is no masked tail block.
    if HW <= 2048:
        ts = HW
    else:
        ts = 2048
        for cand in (4096, 3584, 3072, 2560, 2048, 1536, 1024, 512, 256, 128):
            if HW % cand == 0:
                ts = cand
                break
    n_s = pl.cdiv(HW, ts)

    # Batch images per step until per-step HBM traffic reaches the target.
    per_image_bytes = ts * (Cin * in_bytes + Cout * out_bytes)
    Nb = max(1, min(N, int(target_step_bytes // max(per_image_bytes, 1))))
    # Keep at least 2 grid blocks (both v7x TensorCores busy) when possible.
    if n_s == 1 and N >= 2 and Nb >= N:
        Nb = (N + 1) // 2
    # Prefer an Nb that divides N so there is no masked tail batch block.
    while Nb > 1 and N % Nb != 0:
        Nb -= 1
    # Single image covering the whole spatial axis: split the spatial axis
    # instead (128-multiples) so both cores still get work on v7x.
    if N == 1 and n_s == 1 and HW >= 256:
        ts = max(128, ((HW // 2) // 128) * 128)
        n_s = pl.cdiv(HW, ts)

    n_b = pl.cdiv(N, Nb)
    return Nb, ts, n_b, n_s


def shuffle_last(x_nchw, conv_w, gamma, beta, running_mean, running_var,
                 eps=1e-5, out_dtype=None):
    """Fused 1x1 conv (no bias) + BatchNorm2d (eval-mode, running stats) + ReLU.

    x_nchw: (N, Cin, H, W); conv_w: (Cout, Cin, 1, 1) like nn.Conv2d weight.
    out_dtype: set to jnp.bfloat16 if the downstream consumer tolerates it --
               with Cout = 2*Cin the write side dominates HBM traffic, so a
               bf16 output is the bigger bandwidth win than bf16 inputs.
    """
    N, Cin, H, W = x_nchw.shape
    Cout = conv_w.shape[0]
    HW = H * W
    out_dtype = x_nchw.dtype if out_dtype is None else out_dtype

    # Fold eval-mode BN into weight/bias once (O(Cin*Cout), trivially cheap).
    scale = gamma / jnp.sqrt(running_var + eps)                       # (Cout,)
    w2 = (conv_w.reshape(Cout, Cin) * scale[:, None]).astype(x_nchw.dtype)
    bias = (beta - running_mean * scale).reshape(Cout, 1).astype(jnp.float32)

    # NCHW -> (N, Cin, H*W): pure reshape of contiguous data, no HBM transpose.
    # NOTE: deliberately no wrapper-side dtype cast of x -- a standalone
    # f32->bf16 cast is an extra full HBM pass on a memory-bound op.
    x3 = x_nchw.reshape(N, Cin, HW)

    in_bytes = x3.dtype.itemsize
    out_bytes = jnp.dtype(out_dtype).itemsize
    Nb, ts, n_b, n_s = _choose_tiling(N, Cin, Cout, HW, in_bytes, out_bytes)

    # Explicit VMEM budget: double-buffered in/out tiles + f32 matmul
    # intermediate + folded weight/bias; give the compiler 2x headroom but
    # stay well under v7x's 64 MiB physical VMEM.
    vmem_est = (2 * Nb * Cin * ts * in_bytes
                + 2 * Nb * Cout * ts * out_bytes
                + Nb * Cout * ts * 4
                + Cout * Cin * 4 + Cout * 4)
    vmem_limit = int(min(48 * 1024 * 1024, max(32 * 1024 * 1024, 2 * vmem_est)))

    out3 = pl.pallas_call(
        _shuffle_last_kernel,
        out_shape=jax.ShapeDtypeStruct((N, Cout, HW), out_dtype),
        grid_spec=pltpu.PrefetchScalarGridSpec(
            num_scalar_prefetch=0,
            grid=(n_b, n_s),
            in_specs=[
                pl.BlockSpec((Cout, Cin), lambda b, s: (0, 0)),        # folded W (resident)
                pl.BlockSpec((Cout, 1), lambda b, s: (0, 0)),          # folded bias (resident)
                pl.BlockSpec((Nb, Cin, ts), lambda b, s: (b, 0, s)),   # x tile (Nb images)
            ],
            out_specs=pl.BlockSpec((Nb, Cout, ts), lambda b, s: (b, 0, s)),
        ),
        compiler_params=pltpu.CompilerParams(
            dimension_semantics=("parallel", "parallel"),
            vmem_limit_bytes=vmem_limit),
    )(w2, bias, x3)

    return out3.reshape(N, Cout, H, W)


if __name__ == "__main__":
    # Small shapes consistent with ShuffleLast(w_in, w_out).
    batch, w_in, w_out, spatial = 2, 32, 64, 16
    eps = 1e-5

    key = jax.random.PRNGKey(0)
    kx, kw, km, kv, kg, kb = jax.random.split(key, 6)

    x = jax.random.normal(kx, (batch, w_in, spatial, spatial), dtype=jnp.float32)
    # Conv2d(w_in, w_out, k=1, bias=False) weight: (w_out, w_in, 1, 1)
    conv_w = jax.random.normal(kw, (w_out, w_in, 1, 1), dtype=jnp.float32) * 0.05
    # BatchNorm2d(w_out) params (eval-mode folding with running stats).
    gamma = 1.0 + 0.1 * jax.random.normal(kg, (w_out,), dtype=jnp.float32)
    beta = 0.1 * jax.random.normal(kb, (w_out,), dtype=jnp.float32)
    running_mean = 0.1 * jax.random.normal(km, (w_out,), dtype=jnp.float32)
    running_var = jnp.abs(jax.random.normal(kv, (w_out,), dtype=jnp.float32)) + 0.5

    out = shuffle_last(x, conv_w, gamma, beta, running_mean, running_var, eps=eps)
    out = jax.block_until_ready(out)

    # Pure-JAX reference (same math) for a sanity check (f32 path).
    s = gamma / jnp.sqrt(running_var + eps)
    y_ref = jnp.einsum('oc,nchw->nohw', conv_w.reshape(w_out, w_in), x)
    y_ref = y_ref * s[None, :, None, None] \
        + (beta - running_mean * s)[None, :, None, None]
    y_ref = jnp.maximum(y_ref, 0.0)

    assert out.shape == (batch, w_out, spatial, spatial)
    assert jnp.allclose(out, y_ref, atol=1e-4, rtol=1e-4)

    print("KERNEL_OK")
</pallas_src>

<mosaic_0001>
module attributes {stable_mosaic.version = 11 : i64} {
  func.func @_shuffle_last_kernel(%arg0: i32, %arg1: i32, %arg2: memref<64x32xf32, #tpu.memory_space<vmem>>, %arg3: memref<64x1xf32, #tpu.memory_space<vmem>>, %arg4: memref<1x32x256xf32, #tpu.memory_space<vmem>>, %arg5: memref<1x64x256xf32, #tpu.memory_space<vmem>>) attributes {dimension_semantics = [#tpu.dimension_semantics<parallel>, #tpu.dimension_semantics<parallel>], iteration_bounds = array<i64: 2, 1>, scalar_prefetch = 0 : i64, scratch_operands = 0 : i64, tpu.core_type = #tpu.core_type<tc>, window_params = [{pipeline_mode = #tpu.pipeline_mode<synchronous>, transform_indices = @transform_0, window_bounds = array<i64: 64, 32>}, {pipeline_mode = #tpu.pipeline_mode<synchronous>, transform_indices = @transform_1, window_bounds = array<i64: 64, 1>}, {transform_indices = @transform_2, window_bounds = array<i64: 1, 32, 256>}, {transform_indices = @transform_3, window_bounds = array<i64: 1, 64, 256>}]} {
    %c0 = arith.constant 0 : index
    %c0_0 = arith.constant 0 : index
    %0 = vector.load %arg2[%c0, %c0_0] : memref<64x32xf32, #tpu.memory_space<vmem>>, vector<64x32xf32>
    %c0_1 = arith.constant 0 : index
    %c0_2 = arith.constant 0 : index
    %1 = vector.load %arg3[%c0_1, %c0_2] : memref<64x1xf32, #tpu.memory_space<vmem>>, vector<64x1xf32>
    %c0_3 = arith.constant 0 : index
    %c0_4 = arith.constant 0 : index
    %c0_5 = arith.constant 0 : index
    %2 = vector.load %arg4[%c0_3, %c0_4, %c0_5] : memref<1x32x256xf32, #tpu.memory_space<vmem>>, vector<1x32x256xf32>
    %3 = vector.shape_cast %2 : vector<1x32x256xf32> to vector<32x256xf32>
    %cst = arith.constant dense<0.000000e+00> : vector<64x256xf32>
    %4 = tpu.matmul %0, %3, %cst {dimension_numbers = #tpu.dot_dimension_numbers<[1], [0], [0], [1], [0, 0, 1, 1], [], []>} : vector<64x32xf32>, vector<32x256xf32>, vector<64x256xf32> -> vector<64x256xf32>
    %5 = vector.broadcast %1 : vector<64x1xf32> to vector<64x256xf32>
    %6 = arith.addf %4, %5 : vector<64x256xf32>
    %cst_6 = arith.constant 0.000000e+00 : f32
    %7 = vector.broadcast %cst_6 : f32 to vector<64x256xf32>
    %8 = arith.maximumf %6, %7 : vector<64x256xf32>
    %c0_7 = arith.constant 0 : index
    %c0_8 = arith.constant 0 : index
    %c0_9 = arith.constant 0 : index
    %9 = vector.load %arg5[%c0_7, %c0_8, %c0_9] : memref<1x64x256xf32, #tpu.memory_space<vmem>>, vector<1x64x256xf32>
    %10 = vector.shape_cast %9 : vector<1x64x256xf32> to vector<64x256xf32>
    %11 = vector.shape_cast %8 : vector<64x256xf32> to vector<1x64x256xf32>
    tpu.vector_store %arg5[%c0_7, %c0_8, %c0_9], %11 {strides = array<i32>} : memref<1x64x256xf32, #tpu.memory_space<vmem>>, vector<1x64x256xf32>,
    return
  }
  func.func @transform_0(%arg0: i32, %arg1: i32) -> (i32, i32) {
    %c0_i32 = arith.constant 0 : i32
    %c0_i32_0 = arith.constant 0 : i32
    %c0_i32_1 = arith.constant 0 : i32
    return %c0_i32, %c0_i32_0 : i32, i32
  }
  func.func @transform_1(%arg0: i32, %arg1: i32) -> (i32, i32) {
    %c0_i32 = arith.constant 0 : i32
    %c0_i32_0 = arith.constant 0 : i32
    %c0_i32_1 = arith.constant 0 : i32
    return %c0_i32, %c0_i32_0 : i32, i32
  }
  func.func @transform_2(%arg0: i32, %arg1: i32) -> (i32, i32, i32) {
    %c0_i32 = arith.constant 0 : i32
    %c0_i32_0 = arith.constant 0 : i32
    return %arg0, %c0_i32, %arg1 : i32, i32, i32
  }
  func.func @transform_3(%arg0: i32, %arg1: i32) -> (i32, i32, i32) {
    %c0_i32 = arith.constant 0 : i32
    %c0_i32_0 = arith.constant 0 : i32
    return %arg0, %c0_i32, %arg1 : i32, i32, i32
  }
}

</mosaic_0001>

<llo_original>
// kernel: tpu_custom_call.1
$region0: #{tpu_custom_call.1}
  #allocation0 [shape = 'u32[]', space=smem, size = 0x4, offset = 0x4, fixed_abs, tag = 'smem constant byte address 0x4 - core index']
  #allocation1 [shape = 'u32[144,128]{1,0:T(1,128)}', space=vmem, size = 0x12000, scoped, tag = 'internal scratch']
  %s0 = inlined_call_operand.vmem [shape: f32[64,32], index: 0, kind: input, shape index: {}]
  %s1 = inlined_call_operand.vmem [shape: f32[64,1], index: 1, kind: input, shape index: {}]
  %s2 = inlined_call_operand.vmem [shape: f32[2,32,256], index: 2, kind: input, shape index: {}]
  %s3 = inlined_call_operand.hbm [shape: f32[2,64,256], index: 3, kind: output, shape index: {}]
  %s4 = sld [smem:[#allocation0]]
  $region45: #{tpu_custom_call.1} parent=0
    _
  %s6 = ssub.s32 1, %s4
  %s7 = scalar_select 0, %s6, %s4
  $region1: #{tpu_custom_call.1} parent=0
    #allocation2 [shape = 'u8[131072]{0}', space=vmem, size = 0x20000, scoped, tag = 'output window, operand 0']
    #allocation3 [shape = 's32[2]{0}', space=sflag, size = 0x8, scoped, tag = 'scoped memory for tpu_custom_call.1']
    %8 = vsyncpa [#allocation3], 0
    %s9 = scalar_lea.sflag [#allocation3], 1
    %10 = vsyncpa %s9, 0
    loop: start=0, step=1, limit=4
    $region2: #{tpu_custom_call.1} parent=1 // loop_pre_header
      _
    $region3: #{tpu_custom_call.1} parent=1 // loop_header
      %s12 = sphi 0, %s16
      %p13 = scmp.ge.s32.totalorder %s12, 4
      %s19 = sphi 0, %s31
      %s20 = sphi 0, %s27
      %s21 = sphi 0, %s19
      %s22 = sphi 0, %s20
      %s23 = sphi 0, %s21
      %s24 = sphi 0, %s22
      %s32 = sphi 0, %s32
      %s34 = sphi 0, %s32
      %s35 = sphi 0, %s34
      %s49 = sphi 0, %s35
      %s53 = sphi 0, %s53
      %s55 = sphi 0, %s53
      %s56 = sphi 0, %s55
      %s70 = sphi 0, %s56
      %s78 = sphi 0, %s80
      %s81 = sphi 0, %s78
      %s82 = sphi 0, %s81
      %s98 = sphi 0, %s82
      %s106 = sphi 0, %s108
      %s109 = sphi 0, %s106
      %s110 = sphi 0, %s109
      %s126 = sphi 0, %s110
    $region4: #{tpu_custom_call.1} parent=1 // loop_header_branch
      %15 = sbr.rel (%p13) target = $region8
    $region5: #{tpu_custom_call.1} parent=1 // loop_body
      %s17 = ssub.s32 %s12, 1
      %s18 = ssub.s32 %s12, 2
      %s25 = sadd.s32 1, %s20
      %p26 = scmp.ge.s32.totalorder %s25, 1
      %s27 = scalar_select %p26, 0, %s25
      %s28 = sadd.s32 1, %s19
      %s29 = scalar_select %p26, %s28, %s19
      %p30 = scmp.ge.s32.totalorder %s29, 2
      %s31 = scalar_select %p30, 0, %s29
      %s33 = sadd.s32 %s32, 1
      %p36 = scmp.eq.s32.totalorder %s12, 1
      %p37 = scmp.ne.s32.totalorder %s32, %s34
      %p38 = scmp.eq.s32.totalorder %s12, 0
      %p39 = por %p37, %p38
      %p40 = scmp.ne.s32.totalorder %s32, %s34
      %p41 = scmp.eq.s32.totalorder %s17, 1
      %p42 = por %p40, %p41
      %p43 = scmp.ne.s32.totalorder %s34, %s35
      %p44 = scmp.eq.s32.totalorder %s17, 0
      %p45 = por %p43, %p44
      %p46 = scmp.ne.s32.totalorder %s34, %s35
      %p47 = scmp.eq.s32.totalorder %s18, 1
      %p48 = por %p46, %p47
      %p50 = scmp.ne.s32.totalorder %s35, %s49
      %p51 = scmp.eq.s32.totalorder %s18, 0
      %p52 = por %p50, %p51
      %s54 = sadd.s32 %s53, 1
      %p57 = scmp.eq.s32.totalorder %s12, 1
      %p58 = scmp.ne.s32.totalorder %s53, %s55
      %p59 = scmp.eq.s32.totalorder %s12, 0
      %p60 = por %p58, %p59
      %p61 = scmp.ne.s32.totalorder %s53, %s55
      %p62 = scmp.eq.s32.totalorder %s17, 1
      %p63 = por %p61, %p62
      %p64 = scmp.ne.s32.totalorder %s55, %s56
      %p65 = scmp.eq.s32.totalorder %s17, 0
      %p66 = por %p64, %p65
      %p67 = scmp.ne.s32.totalorder %s55, %s56
      %p68 = scmp.eq.s32.totalorder %s18, 1
      %p69 = por %p67, %p68
      %p71 = scmp.ne.s32.totalorder %s56, %s70
      %p72 = scmp.eq.s32.totalorder %s18, 0
      %p73 = por %p71, %p72
      %s74 = ssub.s32 %s19, %s31
      %s75 = ssub.s32 %s20, %s27
      %s76 = sor.u32 %s74, %s75
      %p77 = scmp.eq.s32.totalorder %s76, 0
      %s79 = sadd.s32 %s78, 1
      %s80 = scalar_select %p77, %s78, %s79
      %p83 = pneg %p77
      %p84 = scmp.eq.s32.totalorder %s12, 1
      %p85 = por %p83, %p84
      %p86 = scmp.ne.s32.totalorder %s78, %s81
      %p87 = scmp.eq.s32.totalorder %s12, 0
      %p88 = por %p86, %p87
      %p89 = scmp.ne.s32.totalorder %s78, %s81
      %p90 = scmp.eq.s32.totalorder %s17, 1
      %p91 = por %p89, %p90
      %p92 = scmp.ne.s32.totalorder %s81, %s82
      %p93 = scmp.eq.s32.totalorder %s17, 0
      %p94 = por %p92, %p93
      %p95 = scmp.ne.s32.totalorder %s81, %s82
      %p96 = scmp.eq.s32.totalorder %s18, 1
      %p97 = por %p95, %p96
      %p99 = scmp.ne.s32.totalorder %s82, %s98
      %p100 = scmp.eq.s32.totalorder %s18, 0
      %p101 = por %p99, %p100
      %s102 = ssub.s32 %s19, %s31
      %s103 = ssub.s32 %s20, %s27
      %s104 = sor.u32 %s102, %s103
      %p105 = scmp.eq.s32.totalorder %s104, 0
      %s107 = sadd.s32 %s106, 1
      %s108 = scalar_select %p105, %s106, %s107
      %p111 = pneg %p105
      %p112 = scmp.eq.s32.totalorder %s12, 1
      %p113 = por %p111, %p112
      %p114 = scmp.ne.s32.totalorder %s106, %s109
      %p115 = scmp.eq.s32.totalorder %s12, 0
      %p116 = por %p114, %p115
      %p117 = scmp.ne.s32.totalorder %s106, %s109
      %p118 = scmp.eq.s32.totalorder %s17, 1
      %p119 = por %p117, %p118
      %p120 = scmp.ne.s32.totalorder %s109, %s110
      %p121 = scmp.eq.s32.totalorder %s17, 0
      %p122 = por %p120, %p121
      %p123 = scmp.ne.s32.totalorder %s109, %s110
      %p124 = scmp.eq.s32.totalorder %s18, 1
      %p125 = por %p123, %p124
      %p127 = scmp.ne.s32.totalorder %s110, %s126
      %p128 = scmp.eq.s32.totalorder %s18, 0
      %p129 = por %p127, %p128
      %p130 = scmp.le.s32.totalorder 1, %s12
      %p131 = scmp.lt.s32.totalorder %s12, 3
      %p132 = pnand %p130, %p131
      %p133 = pneg %p132
      // Predicated region
      $region9: #{tpu_custom_call.1} parent=5 // pred_check
        _
      $region10: #{tpu_custom_call.1} parent=5 // pred_check_branch
        %135 = sbr.rel (%p132) target = $region12
      $region11: #{tpu_custom_call.1} parent=5 // pred_region
        %s136 = ssub.s32 %s12, 1
        // Predicated region
        $region13: #{tpu_custom_call.1} parent=11 // pred_check
          %p137 = pneg %p45
        $region14: #{tpu_custom_call.1} parent=11 // pred_check_branch
          %139 = sbr.rel (%p137) target = $region16
        $region15: #{tpu_custom_call.1} parent=11 // pred_region
          _
        $region16: #{tpu_custom_call.1} parent=11 // pred_fallthru
          _
        // Predicated region
        $region17: #{tpu_custom_call.1} parent=11 // pred_check
          %p140 = pneg %p66
        $region18: #{tpu_custom_call.1} parent=11 // pred_check_branch
          %142 = sbr.rel (%p140) target = $region20
        $region19: #{tpu_custom_call.1} parent=11 // pred_region
          _
        $region20: #{tpu_custom_call.1} parent=11 // pred_fallthru
          _
      $region12: #{tpu_custom_call.1} parent=5 // pred_fallthru
        _
      %p143 = scmp.lt.s32.totalorder %s12, 2
      // Predicated region
      $region21: #{tpu_custom_call.1} parent=5 // pred_check
        %p144 = pneg %p143
      $region22: #{tpu_custom_call.1} parent=5 // pred_check_branch
        %146 = sbr.rel (%p144) target = $region24
      $region23: #{tpu_custom_call.1} parent=5 // pred_region
        // Predicated region
        $region25: #{tpu_custom_call.1} parent=23 // pred_check
          %p147 = pneg %p88
        $region26: #{tpu_custom_call.1} parent=23 // pred_check_branch
          %149 = sbr.rel (%p147) target = $region28
        $region27: #{tpu_custom_call.1} parent=23 // pred_region
          %s150 = smul.u32 2, %s20
          %p151 = scmp.lt.s32.totalorder %s19, 1
          %s152 = scalar_select %p151, %s19, 1
          %p153 = scmp.lt.s32.totalorder %s150, 1
          %s154 = scalar_select %p153, %s150, 1
          %s155 = smul.addr %s152, 8
          %s156 = sadd.s32 %s154, %s155
          %s157 = smul.addr %s156, 8
          %s158 = scalar_lea.vmem %s2, %s157
          %s159 = smul.u32 2, %s20
        $region28: #{tpu_custom_call.1} parent=23 // pred_fallthru
          _
      $region24: #{tpu_custom_call.1} parent=5 // pred_fallthru
        _
      %p160 = scmp.le.s32.totalorder 1, %s12
      %p161 = scmp.lt.s32.totalorder %s12, 3
      %p162 = pnand %p160, %p161
      %p163 = pneg %p162
      // Predicated region
      $region29: #{tpu_custom_call.1} parent=5 // pred_check
        _
      $region30: #{tpu_custom_call.1} parent=5 // pred_check_branch
        %165 = sbr.rel (%p162) target = $region32
      $region31: #{tpu_custom_call.1} parent=5 // pred_region
        %s166 = ssub.s32 %s12, 1
        %p167 = pneg %p45
        %p168 = pneg %p42
        %p169 = pneg %p66
        %p170 = pneg %p63
        %s171 = smul.u32 2, %s22
        %p172 = scmp.lt.s32.totalorder %s21, 1
        %s173 = scalar_select %p172, %s21, 1
        %p174 = scmp.lt.s32.totalorder %s171, 1
        %s175 = scalar_select %p174, %s171, 1
        %s176 = smul.addr %s173, 8
        %s177 = sadd.s32 %s175, %s176
        %s178 = smul.addr %s177, 8
        %s179 = scalar_lea.vmem %s2, %s178
        %p180 = pneg %p94
        %p181 = pneg %p91
        %p182 = pneg %p122
        %p183 = pneg %p119
        %s184 = sand.u32 %s109, 1
        %s185 = scalar_lea.sflag [#allocation3], %s184
        %s186 = sand.u32 %s109, 1
        %s187 = smul.addr %s186, 128
        %s188 = scalar_lea.vmem [#allocation2], %s187
        %s189 = smul.u32 2, %s22
        %p190 = scmp.lt.s32.totalorder %s21, 1
        %s191 = scalar_select %p190, %s21, 1
        %p192 = scmp.lt.s32.totalorder %s189, 1
        %s193 = scalar_select %p192, %s189, 1
        %s194 = smul.addr %s191, 8
        %s195 = sadd.s32 %s193, %s194
        %s196 = smul.addr %s195, 8
        %s197 = scalar_lea.vmem %s2, %s196
        %s198 = smul.u32 2, %s22
        %s199 = smul.u32 2, %s22
        %v200 = vld [vmem:[%s0] sm:$0xff]
        %v201 = vld [vmem:[%s0 + $0x8] sm:$0xff]
        %v202 = vld [vmem:[%s0 + $0x10] sm:$0xff]
        %v203 = vld [vmem:[%s0 + $0x18] sm:$0xff]
        %v204 = vld [vmem:[%s0 + $0x20] sm:$0xff]
        %v205 = vld [vmem:[%s0 + $0x28] sm:$0xff]
        %v206 = vld [vmem:[%s0 + $0x30] sm:$0xff]
        %v207 = vld [vmem:[%s0 + $0x38] sm:$0xff]
        %v208 = vld [vmem:[%s1] sm:$0xff]
        %v209 = vld [vmem:[%s1 + $0x8] sm:$0xff]
        %v210 = vld [vmem:[%s1 + $0x10] sm:$0xff]
        %v211 = vld [vmem:[%s1 + $0x18] sm:$0xff]
        %v212 = vld [vmem:[%s1 + $0x20] sm:$0xff]
        %v213 = vld [vmem:[%s1 + $0x28] sm:$0xff]
        %v214 = vld [vmem:[%s1 + $0x30] sm:$0xff]
        %v215 = vld [vmem:[%s1 + $0x38] sm:$0xff]
        %v216 = vld [vmem:[%s197] sm:$0xff]
        %v217 = vld [vmem:[%s197 + $0x8] sm:$0xff]
        %v218 = vld [vmem:[%s197 + $0x10] sm:$0xff]
        %v219 = vld [vmem:[%s197 + $0x18] sm:$0xff]
        %v220 = vld [vmem:[%s197 + $0x20] sm:$0xff]
        %v221 = vld [vmem:[%s197 + $0x28] sm:$0xff]
        %v222 = vld [vmem:[%s197 + $0x30] sm:$0xff]
        %v223 = vld [vmem:[%s197 + $0x38] sm:$0xff]
        %225 = vset.pattern.permute.xlu0 0
        %226 = vperm.xlu0 %225, %v208
        %v227 = vpop.permute.xlu0 %226
        %230 = vset.pattern.permute.xlu0 0
        %231 = vperm.xlu0 %230, %v209
        %v232 = vpop.permute.xlu0 %231
        %235 = vset.pattern.permute.xlu0 0
        %236 = vperm.xlu0 %235, %v210
        %v237 = vpop.permute.xlu0 %236
        %240 = vset.pattern.permute.xlu0 0
        %241 = vperm.xlu0 %240, %v211
        %v242 = vpop.permute.xlu0 %241
        %245 = vset.pattern.permute.xlu0 0
        %246 = vperm.xlu0 %245, %v212
        %v247 = vpop.permute.xlu0 %246
        %250 = vset.pattern.permute.xlu0 0
        %251 = vperm.xlu0 %250, %v213
        %v252 = vpop.permute.xlu0 %251
        %255 = vset.pattern.permute.xlu0 0
        %256 = vperm.xlu0 %255, %v214
        %v257 = vpop.permute.xlu0 %256
        %260 = vset.pattern.permute.xlu0 0
        %261 = vperm.xlu0 %260, %v215
        %v262 = vpop.permute.xlu0 %261
        %vm264 = vcmask 261120
        %v266 = vsel %vm264, %v200, 0
        %v269 = vsel %vm264, %v201, 0
        %v272 = vsel %vm264, %v202, 0
        %v275 = vsel %vm264, %v203, 0
        %v278 = vsel %vm264, %v204, 0
        %v281 = vsel %vm264, %v205, 0
        %v284 = vsel %vm264, %v206, 0
        %v287 = vsel %vm264, %v207, 0
        %289 = vmatprep.subr.mxu0 0.0
        %290 = vmatpush1.msra.mxu0 0.0
        %291 = vmatprep.subr.mxu0 0.0
        %292 = vmatpush1.msra.mxu0 0.0
        %293 = vmatprep.subr.mxu0 0.0
        %294 = vmatpush1.msra.mxu0 0.0
        %295 = vmatprep.subr.mxu0 0.0
        %296 = vmatpush1.msra.mxu0 0.0
        %297 = vmatprep.subr.mxu0 0.0
        %298 = vmatpush1.msra.mxu0 0.0
        %299 = vmatprep.subr.mxu0 0.0
        %300 = vmatpush1.msra.mxu0 0.0
        %301 = vmatprep.subr.mxu0 0.0
        %302 = vmatpush1.msra.mxu0 0.0
        %303 = vmatprep.subr.mxu0 0.0
        %304 = vmatpush1.msra.mxu0 0.0
        %305 = vmatprep.subr.mxu0 0.0
        %306 = vmatpush1.msra.mxu0 0.0
        %307 = vmatprep.subr.mxu0 0.0
        %308 = vmatpush1.msra.mxu0 0.0
        %309 = vmatprep.subr.mxu0 0.0
        %310 = vmatpush1.msra.mxu0 0.0
        %311 = vmatprep.subr.mxu0 0.0
        %312 = vmatpush1.msra.mxu0 0.0
        %313 = vmatprep.subr.mxu0 %v223
        %314 = vmatpush1.msra.mxu0 %v222
        %315 = vmatprep.subr.mxu0 %v221
        %316 = vmatpush1.msra.mxu0 %v220
        %317 = vmatprep.subr.mxu0 %v219
        %318 = vmatpush1.msra.mxu0 %v218
        %319 = vmatprep.subr.mxu0 %v217
        %320 = vmatpush1.msra.mxu0 %v216
        %321 = vmatprep.subr.mxu0 0.0
        %322 = vmatpush2.msra.mxu0 0.0
        %323 = vmatprep.subr.mxu0 0.0
        %324 = vmatpush2.msra.mxu0 0.0
        %325 = vmatprep.subr.mxu0 0.0
        %326 = vmatpush2.msra.mxu0 0.0
        %327 = vmatprep.subr.mxu0 0.0
        %328 = vmatpush2.msra.mxu0 0.0
        %329 = vmatprep.subr.mxu0 0.0
        %330 = vmatpush2.msra.mxu0 0.0
        %331 = vmatprep.subr.mxu0 0.0
        %332 = vmatpush2.msra.mxu0 0.0
        %333 = vmatprep.subr.mxu0 0.0
        %334 = vmatpush2.msra.mxu0 0.0
        %335 = vmatprep.subr.mxu0 0.0
        %336 = vmatpush2.msra.mxu0 0.0
        %337 = vmatprep.subr.mxu0 0.0
        %338 = vmatpush2.msra.mxu0 0.0
        %339 = vmatprep.subr.mxu0 0.0
        %340 = vmatpush2.msra.mxu0 0.0
        %341 = vmatprep.subr.mxu0 0.0
        %342 = vmatpush2.msra.mxu0 0.0
        %343 = vmatprep.subr.mxu0 0.0
        %344 = vmatpush2.msra.mxu0 0.0
        %345 = vmatprep.subr.mxu0 0.0
        %346 = vmatpush2.msra.mxu0 0.0
        %347 = vmatprep.subr.mxu0 0.0
        %348 = vmatpush2.msra.mxu0 0.0
        %349 = vmatprep.subr.mxu0 0.0
        %350 = vmatpush2.msra.mxu0 0.0
        %351 = vmatprep.subr.mxu0 0.0
        %352 = vmatpush2.msra.mxu0 0.0
        %353 = vmatprep.mubr.f32.mxu0 0.0
        %354 = vmatmul.mubr.f32.gmra.mxu0 %v266
        %v355 = vpop.f32.mrf.mxu0
        %v356 = vadd.f32 %v227, %v355
        %v357 = vpop.f32.mrf.mxu0
        %v358 = vadd.f32 %v227, %v357
        %359 = vmatprep.mubr.f32.mxu0 0.0
        %360 = vmatmul.mubr.f32.gmra.mxu0 %v269
        %v361 = vpop.f32.mrf.mxu0
        %v362 = vadd.f32 %v232, %v361
        %v363 = vpop.f32.mrf.mxu0
        %v364 = vadd.f32 %v232, %v363
        %365 = vmatprep.mubr.f32.mxu0 0.0
        %366 = vmatmul.mubr.f32.gmra.mxu0 %v272
        %v367 = vpop.f32.mrf.mxu0
        %v368 = vadd.f32 %v237, %v367
        %v369 = vpop.f32.mrf.mxu0
        %v370 = vadd.f32 %v237, %v369
        %371 = vmatprep.mubr.f32.mxu0 0.0
        %372 = vmatmul.mubr.f32.gmra.mxu0 %v275
        %v373 = vpop.f32.mrf.mxu0
        %v374 = vadd.f32 %v242, %v373
        %v375 = vpop.f32.mrf.mxu0
        %v376 = vadd.f32 %v242, %v375
        %377 = vmatprep.mubr.f32.mxu0 0.0
        %378 = vmatmul.mubr.f32.gmra.mxu0 %v278
        %v379 = vpop.f32.mrf.mxu0
        %v380 = vadd.f32 %v247, %v379
        %v381 = vpop.f32.mrf.mxu0
        %v382 = vadd.f32 %v247, %v381
        %383 = vmatprep.mubr.f32.mxu0 0.0
        %384 = vmatmul.mubr.f32.gmra.mxu0 %v281
        %v385 = vpop.f32.mrf.mxu0
        %v386 = vadd.f32 %v252, %v385
        %v387 = vpop.f32.mrf.mxu0
        %v388 = vadd.f32 %v252, %v387
        %389 = vmatprep.mubr.f32.mxu0 0.0
        %390 = vmatmul.mubr.f32.gmra.mxu0 %v284
        %v391 = vpop.f32.mrf.mxu0
        %v392 = vadd.f32 %v257, %v391
        %v393 = vpop.f32.mrf.mxu0
        %v394 = vadd.f32 %v257, %v393
        %395 = vmatprep.mubr.f32.mxu0 0.0
        %396 = vmatmul.mubr.f32.gmra.mxu0 %v287
        %v397 = vpop.f32.mrf.mxu0
        %v398 = vadd.f32 %v262, %v397
        %v399 = vpop.f32.mrf.mxu0
        %v400 = vadd.f32 %v262, %v399
        %401 = vdwg.mxu0
        %v402 = vmax.f32 %v356, 0.0
        %v403 = vmax.f32 %v358, 0.0
        %v404 = vmax.f32 %v362, 0.0
        %v405 = vmax.f32 %v364, 0.0
        %v406 = vmax.f32 %v368, 0.0
        %v407 = vmax.f32 %v370, 0.0
        %v408 = vmax.f32 %v374, 0.0
        %v409 = vmax.f32 %v376, 0.0
        %v410 = vmax.f32 %v380, 0.0
        %v411 = vmax.f32 %v382, 0.0
        %v412 = vmax.f32 %v386, 0.0
        %v413 = vmax.f32 %v388, 0.0
        %v414 = vmax.f32 %v392, 0.0
        %v415 = vmax.f32 %v394, 0.0
        %v416 = vmax.f32 %v398, 0.0
        %v417 = vmax.f32 %v400, 0.0
        %418 = vst [vmem:[%s188] sm:$0xff] %v402
        %419 = vst [vmem:[%s188 + $0x8] sm:$0xff] %v403
        %420 = vst [vmem:[%s188 + $0x10] sm:$0xff] %v404
        %421 = vst [vmem:[%s188 + $0x18] sm:$0xff] %v405
        %422 = vst [vmem:[%s188 + $0x20] sm:$0xff] %v406
        %423 = vst [vmem:[%s188 + $0x28] sm:$0xff] %v407
        %424 = vst [vmem:[%s188 + $0x30] sm:$0xff] %v408
        %425 = vst [vmem:[%s188 + $0x38] sm:$0xff] %v409
        %426 = vst [vmem:[%s188 + $0x40] sm:$0xff] %v410
        %427 = vst [vmem:[%s188 + $0x48] sm:$0xff] %v411
        %428 = vst [vmem:[%s188 + $0x50] sm:$0xff] %v412
        %429 = vst [vmem:[%s188 + $0x58] sm:$0xff] %v413
        %430 = vst [vmem:[%s188 + $0x60] sm:$0xff] %v414
        %431 = vst [vmem:[%s188 + $0x68] sm:$0xff] %v415
        %432 = vst [vmem:[%s188 + $0x70] sm:$0xff] %v416
        %433 = vst [vmem:[%s188 + $0x78] sm:$0xff] %v417
        %s434 = sand.u32 %s109, 1
        %s435 = scalar_lea.sflag [#allocation3], %s434
        %s436 = sand.u32 %s109, 1
        %s437 = smul.addr %s436, 128
        %s438 = scalar_lea.vmem [#allocation2], %s437
        // Predicated region
        $region33: #{tpu_custom_call.1} parent=31 // pred_check
          %p439 = pneg %p119
        $region34: #{tpu_custom_call.1} parent=31 // pred_check_branch
          %441 = sbr.rel (%p439) target = $region36
        $region35: #{tpu_custom_call.1} parent=31 // pred_region
          %s442 = smul.u32 2, %s22
          %s444 = ssub.s32 2048, 2048
          %445 = vsyncadd %s435, %s444
          %s446 = smul.addr %s21, 16
          %s447 = sadd.s32 %s442, %s446
          %s448 = smul.addr %s447, 128
          %s449 = scalar_lea.hbm %s3, %s448
          %s450 = sshll.u32 %s438, 4
          %s451 = int_to_ptr.vmem [resolvable:$true] %s450
          %456 = dma.vmem_to_hbm [thread:$0]  %s451, 2048, %s449, %s435, 256, 256, 16
        $region36: #{tpu_custom_call.1} parent=31 // pred_fallthru
          _
      $region32: #{tpu_custom_call.1} parent=5 // pred_fallthru
        _
      %p457 = scmp.le.s32.totalorder 2, %s12
      // Predicated region
      $region37: #{tpu_custom_call.1} parent=5 // pred_check
        %p458 = pneg %p457
      $region38: #{tpu_custom_call.1} parent=5 // pred_check_branch
        %460 = sbr.rel (%p458) target = $region40
      $region39: #{tpu_custom_call.1} parent=5 // pred_region
        %s461 = ssub.s32 %s12, 2
        // Predicated region
        $region41: #{tpu_custom_call.1} parent=39 // pred_check
          %p462 = pneg %p125
        $region42: #{tpu_custom_call.1} parent=39 // pred_check_branch
          %464 = sbr.rel (%p462) target = $region44
        $region43: #{tpu_custom_call.1} parent=39 // pred_region
          %s465 = sand.u32 %s110, 1
          %s466 = scalar_lea.sflag [#allocation3], %s465
          %s467 = sand.u32 %s110, 1
          %s468 = smul.addr %s467, 128
          %s469 = scalar_lea.vmem [#allocation2], %s468
          %470 = dma.done %s466, 2048
        $region44: #{tpu_custom_call.1} parent=39 // pred_fallthru
          _
      $region40: #{tpu_custom_call.1} parent=5 // pred_fallthru
        _
    $region6: #{tpu_custom_call.1} parent=1 // loop_footer
      %s16 = sadd.s32 1, %s12
    $region7: #{tpu_custom_call.1} parent=1 // loop_footer_branch
      %11 = sbr.rel target = $region3
    $region8: #{tpu_custom_call.1} parent=1 // loop_exit
      _
    %471 = vsyncpa [#allocation3], 1
    %s472 = scalar_lea.sflag [#allocation3], 1
    %473 = vsyncpa %s472, 1

</llo_original>
